<compile_context>
chip_gen: v5e
topology: v5e:2x2
jax: 0.10.0
libtpu: 0.0.40
codegen_flags: <defaults>
</compile_context>

<pallas_src>
import jax
import jax.numpy as jnp
from jax.experimental import pallas as pl
from jax.experimental.pallas import tpu as pltpu


def _round_up(n, m):
    return ((n + m - 1) // m) * m


# ---------------------------------------------------------------------------
# Kernel
# ---------------------------------------------------------------------------
def _encoder_kernel(x_ref, a_ref, w1_ref, b1_ref, w2_ref, b2_ref, o_ref, xa_ref):
    """Two fused Linear+ReLU layers on one batch tile (everything in VMEM).

    NOTE: when B % tb != 0 the final tile computes on Pallas-padded (garbage)
    rows; all math here is row-independent and the output store is masked to
    valid rows, so this is only wasted work.  Do not add cross-row reductions
    without masking those rows first.
    """
    cdt = w1_ref.dtype                       # compute dtype (bf16 or f32)
    obs = x_ref.shape[1]

    # Fused concat: stage x and action into one (tb, obs+act) VMEM row block so
    # layer 1 is a single K=(obs+act) matmul (one MXU sequence, one W1 stream).
    xa_ref[:, :obs] = x_ref[...].astype(xa_ref.dtype)
    xa_ref[:, obs:] = a_ref[...].astype(xa_ref.dtype)

    # Layer 1: f32 MXU accumulation, f32 bias + ReLU (matches PyTorch up to
    # bf16 weight rounding on the fast path).
    h = jnp.dot(xa_ref[...].astype(cdt), w1_ref[...],
                preferred_element_type=jnp.float32)
    h = jnp.maximum(h + b1_ref[...], 0.0)

    # Layer 2.
    h2 = jnp.dot(h.astype(cdt), w2_ref[...], preferred_element_type=jnp.float32)
    h2 = jnp.maximum(h2 + b2_ref[...], 0.0)

    # Store exactly feature_size columns (static slice of the padded result);
    # no post-call HBM re-copy to strip padding.
    o_ref[...] = h2[:, : o_ref.shape[1]].astype(o_ref.dtype)


# ---------------------------------------------------------------------------
# Param preparation (run ONCE, not per forward call)
# ---------------------------------------------------------------------------
def prepare_params(w1, b1, w2, b2, compute_dtype=jnp.bfloat16):
    """Convert PyTorch-layout Linear params ([out, in]) to kernel layout.

    - transpose to [in, out]
    - zero-pad hidden dims up to multiples of 128 (MXU/lane alignment; harmless
      since padded bias/weights are zero and relu(0)=0, and padded output
      columns are never stored)
    - cast weights to the compute dtype (bf16 halves weight DMA traffic)
    """
    H1, d_in = w1.shape
    H2, _ = w2.shape
    h1p = _round_up(H1, 128)
    h2p = _round_up(H2, 128)

    w1p = jnp.pad(jnp.transpose(w1), ((0, 0), (0, h1p - H1)))         # [obs+act, H1p]
    b1p = jnp.pad(b1, (0, h1p - H1)).reshape(1, h1p).astype(jnp.float32)
    w2p = jnp.pad(jnp.transpose(w2), ((0, h1p - H1), (0, h2p - H2)))  # [H1p, H2p]
    b2p = jnp.pad(b2, (0, h2p - H2)).reshape(1, h2p).astype(jnp.float32)

    return {
        "w1": w1p.astype(compute_dtype),
        "b1": b1p,
        "w2": w2p.astype(compute_dtype),
        "b2": b2p,
        "in_size": d_in,
        "hidden_size": H1,
        "feature_size": H2,
    }


def _choose_batch_tile(B, batch_tile):
    """>=2 grid steps once B >= 128 (so v7x's two TensorCores both get work via
    the 'parallel' grid axis); MXU-aligned tile when large."""
    if B < 128:
        return B                                   # single tile; latency-bound anyway
    tb = min(batch_tile, _round_up(pl.cdiv(B, 2), 8))
    if tb >= 512:
        tb = (tb // 256) * 256                     # MXU-aligned M for big tiles
    return tb


def _vmem_bytes_estimate(tb, obs, act, h1p, h2p, out_w, in_isz, w_isz, out_isz):
    """Rough per-step VMEM footprint (double-buffered streams + scratch)."""
    lane = lambda n: _round_up(n, 128)
    b = 0
    b += 2 * tb * lane(obs) * in_isz               # x tiles (double-buffered)
    b += 2 * tb * lane(act) * in_isz               # action tiles
    b += 2 * tb * lane(out_w) * out_isz            # output tiles
    b += 2 * (_round_up(obs + act, 8) * h1p + h1p * h2p) * w_isz   # weights
    b += 2 * 8 * (h1p + h2p) * 4                   # biases (sublane-padded)
    b += tb * lane(obs + act) * 4                  # xa staging scratch
    b += 2 * tb * (h1p + h2p) * 4                  # f32 intermediates headroom
    return b


# ---------------------------------------------------------------------------
# Forward wrapper
# ---------------------------------------------------------------------------
def vector_encoder_with_action(x, action, prepared, *, batch_tile=1024,
                               out_dtype=None):
    """x: [B, obs_dim], action: [B, action_size] -> [B, feature_size].

    out_dtype defaults to the prepared compute dtype (bf16 fast path -> bf16
    output, halving HBM write traffic).  batch_tile=1024 is a good default on
    v5e/v6e/v7x; sweeping to 2048 on v6e is possible (vmem_limit_bytes tracks
    the footprint automatically).
    """
    B, obs = x.shape
    act = action.shape[1]
    w1, b1, w2, b2 = prepared["w1"], prepared["b1"], prepared["w2"], prepared["b2"]
    assert obs + act == prepared["in_size"], (obs, act, prepared["in_size"])
    h1p = w1.shape[1]
    h2p = w2.shape[1]
    h1 = prepared["hidden_size"]
    h2 = prepared["feature_size"]
    out_w = h2                                      # unpadded width: no post-call slice
    if out_dtype is None:
        out_dtype = w1.dtype
    out_isz = jnp.dtype(out_dtype).itemsize

    tb = _choose_batch_tile(B, batch_tile)
    grid = (pl.cdiv(B, tb),)

    # If producers supply x/action already in the compute dtype, stage in that
    # dtype (drops the in-kernel up-cast); otherwise stage in f32.
    if x.dtype == w1.dtype and action.dtype == w1.dtype:
        stage_dtype = w1.dtype
    else:
        stage_dtype = jnp.float32

    flops = 2 * B * ((obs + act) * h1 + h1 * h2)    # unpadded dims
    bytes_accessed = (
        x.size * x.dtype.itemsize
        + action.size * action.dtype.itemsize
        + (w1.size + w2.size) * w1.dtype.itemsize
        + (b1.size + b2.size) * 4
        + B * out_w * out_isz
    )
    vmem_est = _vmem_bytes_estimate(
        tb, obs, act, h1p, h2p, out_w,
        max(x.dtype.itemsize, action.dtype.itemsize),
        w1.dtype.itemsize, out_isz)
    vmem_limit = int(min(max(2 * vmem_est, 32 << 20), 64 << 20))

    return pl.pallas_call(
        _encoder_kernel,
        out_shape=jax.ShapeDtypeStruct((B, out_w), out_dtype),
        grid_spec=pltpu.PrefetchScalarGridSpec(
            num_scalar_prefetch=0,
            grid=grid,
            in_specs=[
                pl.BlockSpec((tb, obs), lambda i: (i, 0)),         # x batch tile
                pl.BlockSpec((tb, act), lambda i: (i, 0)),         # action batch tile
                pl.BlockSpec((obs + act, h1p), lambda i: (0, 0)),  # W1 (constant)
                pl.BlockSpec((1, h1p), lambda i: (0, 0)),          # b1 (f32)
                pl.BlockSpec((h1p, h2p), lambda i: (0, 0)),        # W2 (constant)
                pl.BlockSpec((1, h2p), lambda i: (0, 0)),          # b2 (f32)
            ],
            out_specs=pl.BlockSpec((tb, out_w), lambda i: (i, 0)),
            scratch_shapes=[pltpu.VMEM((tb, obs + act), stage_dtype)],
        ),
        compiler_params=pltpu.CompilerParams(
            dimension_semantics=("parallel",),
            vmem_limit_bytes=vmem_limit,
        ),
        cost_estimate=pl.CostEstimate(flops=flops, transcendentals=0,
                                      bytes_accessed=bytes_accessed),
    )(x, action, w1, b1, w2, b2)


# ---------------------------------------------------------------------------
# Reference + init (PyTorch-equivalent)
# ---------------------------------------------------------------------------
def init_params(key, obs_dim, action_size, hidden_units):
    """nn.Linear default init: uniform(-1/sqrt(in), 1/sqrt(in))."""
    in_units = [obs_dim + action_size] + list(hidden_units[:-1])
    params = []
    for in_u, out_u in zip(in_units, hidden_units):
        key, kw, kb = jax.random.split(key, 3)
        bound = 1.0 / jnp.sqrt(jnp.float32(in_u))
        w = jax.random.uniform(kw, (out_u, in_u), jnp.float32, -bound, bound)
        b = jax.random.uniform(kb, (out_u,), jnp.float32, -bound, bound)
        params.append((w, b))
    return params


def reference_forward(x, action, params):
    h = jnp.concatenate([x, action], axis=1)
    for w, b in params:
        h = jnp.maximum(h @ w.T + b, 0.0)
    return h


if __name__ == "__main__":
    # Shapes consistent with VectorEncoderWithAction (default hidden [256, 256]).
    B = 32
    OBS_DIM = 12
    ACTION_SIZE = 4
    HIDDEN = [256, 256]

    key = jax.random.PRNGKey(0)
    key, kx, ka = jax.random.split(key, 3)
    x = jax.random.normal(kx, (B, OBS_DIM), jnp.float32)
    action = jax.random.normal(ka, (B, ACTION_SIZE), jnp.float32)

    params = init_params(key, OBS_DIM, ACTION_SIZE, HIDDEN)
    (w1, b1), (w2, b2) = params
    ref = reference_forward(x, action, params)

    # 1) Exact-semantics check: f32 compute, f32 output.
    prep_f32 = prepare_params(w1, b1, w2, b2, compute_dtype=jnp.float32)
    out_f32 = jax.block_until_ready(vector_encoder_with_action(x, action, prep_f32))
    assert out_f32.shape == (B, HIDDEN[-1]), out_f32.shape
    assert out_f32.dtype == jnp.float32
    assert jnp.allclose(out_f32, ref, atol=1e-5, rtol=1e-5), "f32 mismatch vs reference"

    # 2) Fast path: bf16 weights + bf16 output (halves HBM write traffic).
    prep_bf16 = prepare_params(w1, b1, w2, b2, compute_dtype=jnp.bfloat16)
    out_bf16 = jax.block_until_ready(vector_encoder_with_action(x, action, prep_bf16))
    assert out_bf16.shape == (B, HIDDEN[-1]), out_bf16.shape
    assert out_bf16.dtype == jnp.bfloat16
    assert jnp.allclose(out_bf16.astype(jnp.float32), ref, atol=7e-2, rtol=7e-2), \
        "bf16 mismatch vs reference"

    # 3) Multi-tile + non-128 feature_size path: >=2 grid steps (megacore),
    #    masked single-pass output store, padded final batch tile.
    B2, HIDDEN2 = 260, [256, 192]
    key, kx2, ka2, kp2 = jax.random.split(key, 4)
    x2 = jax.random.normal(kx2, (B2, OBS_DIM), jnp.float32)
    a2 = jax.random.normal(ka2, (B2, ACTION_SIZE), jnp.float32)
    params2 = init_params(kp2, OBS_DIM, ACTION_SIZE, HIDDEN2)
    (w1b, b1b), (w2b, b2b) = params2
    ref2 = reference_forward(x2, a2, params2)
    prep2 = prepare_params(w1b, b1b, w2b, b2b, compute_dtype=jnp.float32)
    out2 = jax.block_until_ready(vector_encoder_with_action(x2, a2, prep2))
    assert out2.shape == (B2, HIDDEN2[-1]), out2.shape
    assert jnp.allclose(out2, ref2, atol=1e-5, rtol=1e-5), "multi-tile mismatch vs reference"

    print("KERNEL_OK")
</pallas_src>

<mosaic_0001>
module attributes {stable_mosaic.version = 11 : i64} {
  func.func @_encoder_kernel(%arg0: i32, %arg1: memref<32x12xf32, #tpu.memory_space<vmem>>, %arg2: memref<32x4xf32, #tpu.memory_space<vmem>>, %arg3: memref<16x256xf32, #tpu.memory_space<vmem>>, %arg4: memref<1x256xf32, #tpu.memory_space<vmem>>, %arg5: memref<256x256xf32, #tpu.memory_space<vmem>>, %arg6: memref<1x256xf32, #tpu.memory_space<vmem>>, %arg7: memref<32x256xf32, #tpu.memory_space<vmem>>, %arg8: memref<32x16xf32, #tpu.memory_space<vmem>>) attributes {dimension_semantics = [#tpu.dimension_semantics<parallel>], iteration_bounds = array<i64: 1>, scalar_prefetch = 0 : i64, scratch_operands = 1 : i64, tpu.core_type = #tpu.core_type<tc>, window_params = [{transform_indices = @transform_0, window_bounds = array<i64: 32, 12>}, {transform_indices = @transform_1, window_bounds = array<i64: 32, 4>}, {pipeline_mode = #tpu.pipeline_mode<synchronous>, transform_indices = @transform_2, window_bounds = array<i64: 16, 256>}, {pipeline_mode = #tpu.pipeline_mode<synchronous>, transform_indices = @transform_3, window_bounds = array<i64: 1, 256>}, {pipeline_mode = #tpu.pipeline_mode<synchronous>, transform_indices = @transform_4, window_bounds = array<i64: 256, 256>}, {pipeline_mode = #tpu.pipeline_mode<synchronous>, transform_indices = @transform_5, window_bounds = array<i64: 1, 256>}, {transform_indices = @transform_6, window_bounds = array<i64: 32, 256>}]} {
    %c0 = arith.constant 0 : index
    %c0_0 = arith.constant 0 : index
    %0 = vector.load %arg1[%c0, %c0_0] : memref<32x12xf32, #tpu.memory_space<vmem>>, vector<32x12xf32>
    %c0_1 = arith.constant 0 : index
    %c0_2 = arith.constant 0 : index
    %1 = vector.load %arg8[%c0_1, %c0_2] : memref<32x16xf32, #tpu.memory_space<vmem>>, vector<32x12xf32>
    tpu.vector_store %arg8[%c0_1, %c0_2], %0 {strides = array<i32>} : memref<32x16xf32, #tpu.memory_space<vmem>>, vector<32x12xf32>,
    %c0_3 = arith.constant 0 : index
    %c0_4 = arith.constant 0 : index
    %2 = vector.load %arg2[%c0_3, %c0_4] : memref<32x4xf32, #tpu.memory_space<vmem>>, vector<32x4xf32>
    %c0_5 = arith.constant 0 : index
    %c12 = arith.constant 12 : index
    %3 = vector.load %arg8[%c0_5, %c12] : memref<32x16xf32, #tpu.memory_space<vmem>>, vector<32x4xf32>
    tpu.vector_store %arg8[%c0_5, %c12], %2 {strides = array<i32>} : memref<32x16xf32, #tpu.memory_space<vmem>>, vector<32x4xf32>,
    %c0_6 = arith.constant 0 : index
    %c0_7 = arith.constant 0 : index
    %4 = vector.load %arg8[%c0_6, %c0_7] : memref<32x16xf32, #tpu.memory_space<vmem>>, vector<32x16xf32>
    %c0_8 = arith.constant 0 : index
    %c0_9 = arith.constant 0 : index
    %5 = vector.load %arg3[%c0_8, %c0_9] : memref<16x256xf32, #tpu.memory_space<vmem>>, vector<16x256xf32>
    %cst = arith.constant dense<0.000000e+00> : vector<32x256xf32>
    %6 = tpu.matmul %4, %5, %cst {dimension_numbers = #tpu.dot_dimension_numbers<[1], [0], [0], [1], [0, 0, 1, 1], [], []>} : vector<32x16xf32>, vector<16x256xf32>, vector<32x256xf32> -> vector<32x256xf32>
    %c0_10 = arith.constant 0 : index
    %c0_11 = arith.constant 0 : index
    %7 = vector.load %arg4[%c0_10, %c0_11] : memref<1x256xf32, #tpu.memory_space<vmem>>, vector<1x256xf32>
    %8 = vector.broadcast %7 : vector<1x256xf32> to vector<32x256xf32>
    %9 = arith.addf %6, %8 : vector<32x256xf32>
    %cst_12 = arith.constant 0.000000e+00 : f32
    %10 = vector.broadcast %cst_12 : f32 to vector<32x256xf32>
    %11 = arith.maximumf %9, %10 : vector<32x256xf32>
    %c0_13 = arith.constant 0 : index
    %c0_14 = arith.constant 0 : index
    %12 = vector.load %arg5[%c0_13, %c0_14] : memref<256x256xf32, #tpu.memory_space<vmem>>, vector<256x256xf32>
    %cst_15 = arith.constant dense<0.000000e+00> : vector<32x256xf32>
    %13 = tpu.matmul %11, %12, %cst_15 {dimension_numbers = #tpu.dot_dimension_numbers<[1], [0], [0], [1], [0, 0, 1, 1], [], []>} : vector<32x256xf32>, vector<256x256xf32>, vector<32x256xf32> -> vector<32x256xf32>
    %c0_16 = arith.constant 0 : index
    %c0_17 = arith.constant 0 : index
    %14 = vector.load %arg6[%c0_16, %c0_17] : memref<1x256xf32, #tpu.memory_space<vmem>>, vector<1x256xf32>
    %15 = vector.broadcast %14 : vector<1x256xf32> to vector<32x256xf32>
    %16 = arith.addf %13, %15 : vector<32x256xf32>
    %cst_18 = arith.constant 0.000000e+00 : f32
    %17 = vector.broadcast %cst_18 : f32 to vector<32x256xf32>
    %18 = arith.maximumf %16, %17 : vector<32x256xf32>
    %c0_19 = arith.constant 0 : index
    %c0_20 = arith.constant 0 : index
    %19 = vector.load %arg7[%c0_19, %c0_20] : memref<32x256xf32, #tpu.memory_space<vmem>>, vector<32x256xf32>
    tpu.vector_store %arg7[%c0_19, %c0_20], %18 {strides = array<i32>} : memref<32x256xf32, #tpu.memory_space<vmem>>, vector<32x256xf32>,
    return
  }
  func.func @transform_0(%arg0: i32) -> (i32, i32) {
    %c0_i32 = arith.constant 0 : i32
    %c0_i32_0 = arith.constant 0 : i32
    return %arg0, %c0_i32 : i32, i32
  }
  func.func @transform_1(%arg0: i32) -> (i32, i32) {
    %c0_i32 = arith.constant 0 : i32
    %c0_i32_0 = arith.constant 0 : i32
    return %arg0, %c0_i32 : i32, i32
  }
  func.func @transform_2(%arg0: i32) -> (i32, i32) {
    %c0_i32 = arith.constant 0 : i32
    %c0_i32_0 = arith.constant 0 : i32
    %c0_i32_1 = arith.constant 0 : i32
    return %c0_i32, %c0_i32_0 : i32, i32
  }
  func.func @transform_3(%arg0: i32) -> (i32, i32) {
    %c0_i32 = arith.constant 0 : i32
    %c0_i32_0 = arith.constant 0 : i32
    %c0_i32_1 = arith.constant 0 : i32
    return %c0_i32, %c0_i32_0 : i32, i32
  }
  func.func @transform_4(%arg0: i32) -> (i32, i32) {
    %c0_i32 = arith.constant 0 : i32
    %c0_i32_0 = arith.constant 0 : i32
    %c0_i32_1 = arith.constant 0 : i32
    return %c0_i32, %c0_i32_0 : i32, i32
  }
  func.func @transform_5(%arg0: i32) -> (i32, i32) {
    %c0_i32 = arith.constant 0 : i32
    %c0_i32_0 = arith.constant 0 : i32
    %c0_i32_1 = arith.constant 0 : i32
    return %c0_i32, %c0_i32_0 : i32, i32
  }
  func.func @transform_6(%arg0: i32) -> (i32, i32) {
    %c0_i32 = arith.constant 0 : i32
    %c0_i32_0 = arith.constant 0 : i32
    return %arg0, %c0_i32 : i32, i32
  }
}

</mosaic_0001>

<llo_original>
// kernel: tpu_custom_call.1
$region0: #{tpu_custom_call.1}
  #allocation0 [shape = 'u32[]', space=smem, size = 0x4, offset = 0x4, fixed_abs, tag = 'smem constant byte address 0x4 - core index']
  #allocation1 [shape = 'u32[72,128]{1,0:T(1,128)}', space=vmem, size = 0x9000, scoped, tag = 'internal scratch']
  #allocation2 [shape = 'f32[32,16]{1,0:T(8,128)}', space=vmem, size = 0x4000, scoped, tag = 'scratch operand']
  %s0 = inlined_call_operand.vmem [shape: f32[32,12], index: 0, kind: input, shape index: {}]
  %s1 = inlined_call_operand.vmem [shape: f32[32,4], index: 1, kind: input, shape index: {}]
  %s2 = inlined_call_operand.vmem [shape: f32[16,256], index: 2, kind: input, shape index: {}]
  %s3 = inlined_call_operand.vmem [shape: f32[1,256], index: 3, kind: input, shape index: {}]
  %s4 = inlined_call_operand.hbm [shape: f32[256,256], index: 4, kind: input, shape index: {}]
  %s5 = inlined_call_operand.vmem [shape: f32[1,256], index: 5, kind: input, shape index: {}]
  %s6 = inlined_call_operand.hbm [shape: f32[32,256], index: 6, kind: output, shape index: {}]
  %s7 = sld [smem:[#allocation0]]
  $region38: #{tpu_custom_call.1} parent=0
    _
  %s9 = ssub.s32 1, %s7
  %s10 = scalar_select 0, %s9, %s7
  $region1: #{tpu_custom_call.1} parent=0
    #allocation3 [shape = 'u8[262144]{0}', space=vmem, size = 0x40000, scoped, tag = 'input window, operand 4, single buffered']
    #allocation4 [shape = 's32[1]{0}', space=sflag, size = 0x4, scoped, tag = 'scoped memory for tpu_custom_call.1']
    #allocation5 [shape = 's32[1]{0}', space=sflag, size = 0x4, scoped, tag = 'scoped memory for tpu_custom_call.1']
    #allocation6 [shape = 'u8[32768]{0}', space=vmem, size = 0x8000, scoped, tag = 'output window, operand 0, single buffered']
    %11 = vsyncpa [#allocation4], 0
    %12 = vsyncpa [#allocation5], 0
    // Predicated region
    $region2: #{tpu_custom_call.1} parent=1 // pred_check
      _
    $region3: #{tpu_custom_call.1} parent=1 // pred_check_branch
      %14 = sbr.rel (0) target = $region5
    $region4: #{tpu_custom_call.1} parent=1 // pred_region
      _
    $region5: #{tpu_custom_call.1} parent=1 // pred_fallthru
      _
    // Predicated region
    $region6: #{tpu_custom_call.1} parent=1 // pred_check
      _
    $region7: #{tpu_custom_call.1} parent=1 // pred_check_branch
      %16 = sbr.rel (0) target = $region9
    $region8: #{tpu_custom_call.1} parent=1 // pred_region
      _
    $region9: #{tpu_custom_call.1} parent=1 // pred_fallthru
      _
    // Predicated region
    $region10: #{tpu_custom_call.1} parent=1 // pred_check
      _
    $region11: #{tpu_custom_call.1} parent=1 // pred_check_branch
      %18 = sbr.rel (0) target = $region13
    $region12: #{tpu_custom_call.1} parent=1 // pred_region
      _
    $region13: #{tpu_custom_call.1} parent=1 // pred_fallthru
      _
    // Predicated region
    $region14: #{tpu_custom_call.1} parent=1 // pred_check
      _
    $region15: #{tpu_custom_call.1} parent=1 // pred_check_branch
      %20 = sbr.rel (0) target = $region17
    $region16: #{tpu_custom_call.1} parent=1 // pred_region
      _
    $region17: #{tpu_custom_call.1} parent=1 // pred_fallthru
      _
    // Predicated region
    $region18: #{tpu_custom_call.1} parent=1 // pred_check
      _
    $region19: #{tpu_custom_call.1} parent=1 // pred_check_branch
      %22 = sbr.rel (0) target = $region21
    $region20: #{tpu_custom_call.1} parent=1 // pred_region
      %24 = vsyncadd [#allocation4], 0
      %s25 = sshll.u32 %s4, 4
      %s26 = int_to_ptr.hbm [resolvable:$true] %s25
      %s27 = sshll.u32 [#allocation3], 4
      %s28 = int_to_ptr.vmem [resolvable:$true] %s27
      %33 = dma.hbm_to_vmem [thread:$0]  %s26, 8192, %s28, [#allocation4], 256, 256, 16
    $region21: #{tpu_custom_call.1} parent=1 // pred_fallthru
      _
    // Predicated region
    $region22: #{tpu_custom_call.1} parent=1 // pred_check
      _
    $region23: #{tpu_custom_call.1} parent=1 // pred_check_branch
      %35 = sbr.rel (0) target = $region25
    $region24: #{tpu_custom_call.1} parent=1 // pred_region
      _
    $region25: #{tpu_custom_call.1} parent=1 // pred_fallthru
      _
    // Predicated region
    $region26: #{tpu_custom_call.1} parent=1 // pred_check
      _
    $region27: #{tpu_custom_call.1} parent=1 // pred_check_branch
      %37 = sbr.rel (0) target = $region29
    $region28: #{tpu_custom_call.1} parent=1 // pred_region
      %39 = dma.done [#allocation4], 8192
    $region29: #{tpu_custom_call.1} parent=1 // pred_fallthru
      _
    %v40 = vld [vmem:[%s0] sm:$0xff]
    %v41 = vld [vmem:[%s0 + $0x8] sm:$0xff]
    %v42 = vld [vmem:[%s0 + $0x10] sm:$0xff]
    %v43 = vld [vmem:[%s0 + $0x18] sm:$0xff]
    %vm44 = vcmask 97280
    %45 = vst.msk [vmem:[#allocation2] sm:$0xff] %vm44, %v40
    %46 = vst.msk [vmem:[#allocation2 + $0x8] sm:$0xff] %vm44, %v41
    %47 = vst.msk [vmem:[#allocation2 + $0x10] sm:$0xff] %vm44, %v42
    %48 = vst.msk [vmem:[#allocation2 + $0x18] sm:$0xff] %vm44, %v43
    %v49 = vld [vmem:[%s1] sm:$0xff]
    %v50 = vld [vmem:[%s1 + $0x8] sm:$0xff]
    %v51 = vld [vmem:[%s1 + $0x10] sm:$0xff]
    %v52 = vld [vmem:[%s1 + $0x18] sm:$0xff]
    %57 = vrot.lane.b32.xlu0 %v49, 12
    %v58 = vpop.permute.xlu0 %57
    %59 = vrot.lane.b32.xlu0 %v50, 12
    %v60 = vpop.permute.xlu0 %59
    %61 = vrot.lane.b32.xlu0 %v51, 12
    %v62 = vpop.permute.xlu0 %61
    %63 = vrot.lane.b32.xlu0 %v52, 12
    %v64 = vpop.permute.xlu0 %63
    %vm69 = vcmask 130144
    %70 = vst.msk [vmem:[#allocation2] sm:$0xff] %vm69, %v58
    %71 = vst.msk [vmem:[#allocation2 + $0x8] sm:$0xff] %vm69, %v60
    %72 = vst.msk [vmem:[#allocation2 + $0x10] sm:$0xff] %vm69, %v62
    %73 = vst.msk [vmem:[#allocation2 + $0x18] sm:$0xff] %vm69, %v64
    %v74 = vld [vmem:[#allocation2] sm:$0xff]
    %v75 = vld [vmem:[#allocation2 + $0x8] sm:$0xff]
    %v76 = vld [vmem:[#allocation2 + $0x10] sm:$0xff]
    %v77 = vld [vmem:[#allocation2 + $0x18] sm:$0xff]
    %v78 = vld [vmem:[%s2] sm:$0xff]
    %v79 = vld [vmem:[%s2 + $0x8] sm:$0xff]
    %v80 = vld [vmem:[%s2 + $0x10] sm:$0xff]
    %v81 = vld [vmem:[%s2 + $0x18] sm:$0xff]
    %v82 = vld [vmem:[%s3] sm:$0x3]
    %v84 = vperm.slane %v82, 0
    %v85 = vperm.slane %v82, 1
    %vm88 = vcmask 130048
    %v90 = vsel %vm88, %v74, 0
    %v93 = vsel %vm88, %v75, 0
    %v96 = vsel %vm88, %v76, 0
    %v99 = vsel %vm88, %v77, 0
    %101 = vmatpush.msra.mxu0 0.0
    %102 = vmatpush.msra.mxu0 0.0
    %103 = vmatpush.msra.mxu0 0.0
    %104 = vmatpush.msra.mxu0 0.0
    %105 = vmatpush.msra.mxu0 0.0
    %106 = vmatpush.msra.mxu0 0.0
    %107 = vmatpush.msra.mxu0 0.0
    %108 = vmatpush.msra.mxu0 0.0
    %109 = vmatpush.msra.mxu0 0.0
    %110 = vmatpush.msra.mxu0 0.0
    %111 = vmatpush.msra.mxu0 0.0
    %112 = vmatpush.msra.mxu0 0.0
    %113 = vmatpush.msra.mxu0 0.0
    %114 = vmatpush.msra.mxu0 0.0
    %115 = vmatpush.msra.mxu0 %v80
    %116 = vmatpush.msra.mxu0 %v78
    %117 = vmatmul.f32.gmra.mxu0 %v90
    %v118 = vpop.f32.mrf.mxu0
    %v119 = vadd.f32 %v84, %v118
    %120 = vmatmul.f32.gmra.mxu0 %v93
    %v121 = vpop.f32.mrf.mxu0
    %v122 = vadd.f32 %v84, %v121
    %123 = vmatmul.f32.gmra.mxu0 %v96
    %v124 = vpop.f32.mrf.mxu0
    %v125 = vadd.f32 %v84, %v124
    %126 = vmatmul.f32.gmra.mxu0 %v99
    %v127 = vpop.f32.mrf.mxu0
    %v128 = vadd.f32 %v84, %v127
    %129 = vdwg.mxu0
    %130 = vmatpush.msra.mxu0 0.0
    %131 = vmatpush.msra.mxu0 0.0
    %132 = vmatpush.msra.mxu0 0.0
    %133 = vmatpush.msra.mxu0 0.0
    %134 = vmatpush.msra.mxu0 0.0
    %135 = vmatpush.msra.mxu0 0.0
    %136 = vmatpush.msra.mxu0 0.0
    %137 = vmatpush.msra.mxu0 0.0
    %138 = vmatpush.msra.mxu0 0.0
    %139 = vmatpush.msra.mxu0 0.0
    %140 = vmatpush.msra.mxu0 0.0
    %141 = vmatpush.msra.mxu0 0.0
    %142 = vmatpush.msra.mxu0 0.0
    %143 = vmatpush.msra.mxu0 0.0
    %144 = vmatpush.msra.mxu0 %v81
    %145 = vmatpush.msra.mxu0 %v79
    %146 = vmatmul.f32.gmra.mxu0 %v90
    %v147 = vpop.f32.mrf.mxu0
    %v148 = vadd.f32 %v85, %v147
    %149 = vmatmul.f32.gmra.mxu0 %v93
    %v150 = vpop.f32.mrf.mxu0
    %v151 = vadd.f32 %v85, %v150
    %152 = vmatmul.f32.gmra.mxu0 %v96
    %v153 = vpop.f32.mrf.mxu0
    %v154 = vadd.f32 %v85, %v153
    %155 = vmatmul.f32.gmra.mxu0 %v99
    %v156 = vpop.f32.mrf.mxu0
    %v157 = vadd.f32 %v85, %v156
    %158 = vdwg.mxu0
    %v159 = vmax.f32 %v119, 0.0
    %v160 = vmax.f32 %v148, 0.0
    %v161 = vmax.f32 %v122, 0.0
    %v162 = vmax.f32 %v151, 0.0
    %v163 = vmax.f32 %v125, 0.0
    %v164 = vmax.f32 %v154, 0.0
    %v165 = vmax.f32 %v128, 0.0
    %v166 = vmax.f32 %v157, 0.0
    %v167 = vld [vmem:[#allocation3] sm:$0xff]
    %v168 = vld [vmem:[#allocation3 + $0x8] sm:$0xff]
    %v169 = vld [vmem:[#allocation3 + $0x10] sm:$0xff]
    %v170 = vld [vmem:[#allocation3 + $0x18] sm:$0xff]
    %v171 = vld [vmem:[#allocation3 + $0x20] sm:$0xff]
    %v172 = vld [vmem:[#allocation3 + $0x28] sm:$0xff]
    %v173 = vld [vmem:[#allocation3 + $0x30] sm:$0xff]
    %v174 = vld [vmem:[#allocation3 + $0x38] sm:$0xff]
    %v175 = vld [vmem:[#allocation3 + $0x40] sm:$0xff]
    %v176 = vld [vmem:[#allocation3 + $0x48] sm:$0xff]
    %v177 = vld [vmem:[#allocation3 + $0x50] sm:$0xff]
    %v178 = vld [vmem:[#allocation3 + $0x58] sm:$0xff]
    %v179 = vld [vmem:[#allocation3 + $0x60] sm:$0xff]
    %v180 = vld [vmem:[#allocation3 + $0x68] sm:$0xff]
    %v181 = vld [vmem:[#allocation3 + $0x70] sm:$0xff]
    %v182 = vld [vmem:[#allocation3 + $0x78] sm:$0xff]
    %v183 = vld [vmem:[#allocation3 + $0x80] sm:$0xff]
    %v184 = vld [vmem:[#allocation3 + $0x88] sm:$0xff]
    %v185 = vld [vmem:[#allocation3 + $0x90] sm:$0xff]
    %v186 = vld [vmem:[#allocation3 + $0x98] sm:$0xff]
    %v187 = vld [vmem:[#allocation3 + $0xa0] sm:$0xff]
    %v188 = vld [vmem:[#allocation3 + $0xa8] sm:$0xff]
    %v189 = vld [vmem:[#allocation3 + $0xb0] sm:$0xff]
    %v190 = vld [vmem:[#allocation3 + $0xb8] sm:$0xff]
    %v191 = vld [vmem:[#allocation3 + $0xc0] sm:$0xff]
    %v192 = vld [vmem:[#allocation3 + $0xc8] sm:$0xff]
    %v193 = vld [vmem:[#allocation3 + $0xd0] sm:$0xff]
    %v194 = vld [vmem:[#allocation3 + $0xd8] sm:$0xff]
    %v195 = vld [vmem:[#allocation3 + $0xe0] sm:$0xff]
    %v196 = vld [vmem:[#allocation3 + $0xe8] sm:$0xff]
    %v197 = vld [vmem:[#allocation3 + $0xf0] sm:$0xff]
    %v198 = vld [vmem:[#allocation3 + $0xf8] sm:$0xff]
    %v199 = vld [vmem:[#allocation3 + $0x100] sm:$0xff]
    %v200 = vld [vmem:[#allocation3 + $0x108] sm:$0xff]
    %v201 = vld [vmem:[#allocation3 + $0x110] sm:$0xff]
    %v202 = vld [vmem:[#allocation3 + $0x118] sm:$0xff]
    %v203 = vld [vmem:[#allocation3 + $0x120] sm:$0xff]
    %v204 = vld [vmem:[#allocation3 + $0x128] sm:$0xff]
    %v205 = vld [vmem:[#allocation3 + $0x130] sm:$0xff]
    %v206 = vld [vmem:[#allocation3 + $0x138] sm:$0xff]
    %v207 = vld [vmem:[#allocation3 + $0x140] sm:$0xff]
    %v208 = vld [vmem:[#allocation3 + $0x148] sm:$0xff]
    %v209 = vld [vmem:[#allocation3 + $0x150] sm:$0xff]
    %v210 = vld [vmem:[#allocation3 + $0x158] sm:$0xff]
    %v211 = vld [vmem:[#allocation3 + $0x160] sm:$0xff]
    %v212 = vld [vmem:[#allocation3 + $0x168] sm:$0xff]
    %v213 = vld [vmem:[#allocation3 + $0x170] sm:$0xff]
    %v214 = vld [vmem:[#allocation3 + $0x178] sm:$0xff]
    %v215 = vld [vmem:[#allocation3 + $0x180] sm:$0xff]
    %v216 = vld [vmem:[#allocation3 + $0x188] sm:$0xff]
    %v217 = vld [vmem:[#allocation3 + $0x190] sm:$0xff]
    %v218 = vld [vmem:[#allocation3 + $0x198] sm:$0xff]
    %v219 = vld [vmem:[#allocation3 + $0x1a0] sm:$0xff]
    %v220 = vld [vmem:[#allocation3 + $0x1a8] sm:$0xff]
    %v221 = vld [vmem:[#allocation3 + $0x1b0] sm:$0xff]
    %v222 = vld [vmem:[#allocation3 + $0x1b8] sm:$0xff]
    %v223 = vld [vmem:[#allocation3 + $0x1c0] sm:$0xff]
    %v224 = vld [vmem:[#allocation3 + $0x1c8] sm:$0xff]
    %v225 = vld [vmem:[#allocation3 + $0x1d0] sm:$0xff]
    %v226 = vld [vmem:[#allocation3 + $0x1d8] sm:$0xff]
    %v227 = vld [vmem:[#allocation3 + $0x1e0] sm:$0xff]
    %v228 = vld [vmem:[#allocation3 + $0x1e8] sm:$0xff]
    %v229 = vld [vmem:[#allocation3 + $0x1f0] sm:$0xff]
    %v230 = vld [vmem:[#allocation3 + $0x1f8] sm:$0xff]
    %v231 = vld [vmem:[%s5] sm:$0x3]
    %v233 = vperm.slane %v231, 0
    %v234 = vperm.slane %v231, 1
    %237 = vmatpush.msra.mxu0 %v197
    %238 = vmatpush.msra.mxu0 %v195
    %239 = vmatpush.msra.mxu0 %v193
    %240 = vmatpush.msra.mxu0 %v191
    %241 = vmatpush.msra.mxu0 %v189
    %242 = vmatpush.msra.mxu0 %v187
    %243 = vmatpush.msra.mxu0 %v185
    %244 = vmatpush.msra.mxu0 %v183
    %245 = vmatpush.msra.mxu0 %v181
    %246 = vmatpush.msra.mxu0 %v179
    %247 = vmatpush.msra.mxu0 %v177
    %248 = vmatpush.msra.mxu0 %v175
    %249 = vmatpush.msra.mxu0 %v173
    %250 = vmatpush.msra.mxu0 %v171
    %251 = vmatpush.msra.mxu0 %v169
    %252 = vmatpush.msra.mxu0 %v167
    %253 = vmatmul.f32.gmra.mxu0 %v159
    %v254 = vpop.f32.mrf.mxu0
    %v255 = vadd.f32 %v233, %v254
    %256 = vmatmul.f32.gmra.mxu0 %v161
    %v257 = vpop.f32.mrf.mxu0
    %v258 = vadd.f32 %v233, %v257
    %259 = vmatmul.f32.gmra.mxu0 %v163
    %v260 = vpop.f32.mrf.mxu0
    %v261 = vadd.f32 %v233, %v260
    %262 = vmatmul.f32.gmra.mxu0 %v165
    %v263 = vpop.f32.mrf.mxu0
    %v264 = vadd.f32 %v233, %v263
    %265 = vdwg.mxu0
    %266 = vmatpush.msra.mxu0 %v229
    %267 = vmatpush.msra.mxu0 %v227
    %268 = vmatpush.msra.mxu0 %v225
    %269 = vmatpush.msra.mxu0 %v223
    %270 = vmatpush.msra.mxu0 %v221
    %271 = vmatpush.msra.mxu0 %v219
    %272 = vmatpush.msra.mxu0 %v217
    %273 = vmatpush.msra.mxu0 %v215
    %274 = vmatpush.msra.mxu0 %v213
    %275 = vmatpush.msra.mxu0 %v211
    %276 = vmatpush.msra.mxu0 %v209
    %277 = vmatpush.msra.mxu0 %v207
    %278 = vmatpush.msra.mxu0 %v205
    %279 = vmatpush.msra.mxu0 %v203
    %280 = vmatpush.msra.mxu0 %v201
    %281 = vmatpush.msra.mxu0 %v199
    %282 = vmatmul.f32.gmra.mxu0 %v160
    %v283 = vpop.f32.mrf.mxu0
    %v284 = vadd.f32 %v255, %v283
    %285 = vmatmul.f32.gmra.mxu0 %v162
    %v286 = vpop.f32.mrf.mxu0
    %v287 = vadd.f32 %v258, %v286
    %288 = vmatmul.f32.gmra.mxu0 %v164
    %v289 = vpop.f32.mrf.mxu0
    %v290 = vadd.f32 %v261, %v289
    %291 = vmatmul.f32.gmra.mxu0 %v166
    %v292 = vpop.f32.mrf.mxu0
    %v293 = vadd.f32 %v264, %v292
    %294 = vdwg.mxu0
    %295 = vmatpush.msra.mxu0 %v198
    %296 = vmatpush.msra.mxu0 %v196
    %297 = vmatpush.msra.mxu0 %v194
    %298 = vmatpush.msra.mxu0 %v192
    %299 = vmatpush.msra.mxu0 %v190
    %300 = vmatpush.msra.mxu0 %v188
    %301 = vmatpush.msra.mxu0 %v186
    %302 = vmatpush.msra.mxu0 %v184
    %303 = vmatpush.msra.mxu0 %v182
    %304 = vmatpush.msra.mxu0 %v180
    %305 = vmatpush.msra.mxu0 %v178
    %306 = vmatpush.msra.mxu0 %v176
    %307 = vmatpush.msra.mxu0 %v174
    %308 = vmatpush.msra.mxu0 %v172
    %309 = vmatpush.msra.mxu0 %v170
    %310 = vmatpush.msra.mxu0 %v168
    %311 = vmatmul.f32.gmra.mxu0 %v159
    %v312 = vpop.f32.mrf.mxu0
    %v313 = vadd.f32 %v234, %v312
    %314 = vmatmul.f32.gmra.mxu0 %v161
    %v315 = vpop.f32.mrf.mxu0
    %v316 = vadd.f32 %v234, %v315
    %317 = vmatmul.f32.gmra.mxu0 %v163
    %v318 = vpop.f32.mrf.mxu0
    %v319 = vadd.f32 %v234, %v318
    %320 = vmatmul.f32.gmra.mxu0 %v165
    %v321 = vpop.f32.mrf.mxu0
    %v322 = vadd.f32 %v234, %v321
    %323 = vdwg.mxu0
    %324 = vmatpush.msra.mxu0 %v230
    %325 = vmatpush.msra.mxu0 %v228
    %326 = vmatpush.msra.mxu0 %v226
    %327 = vmatpush.msra.mxu0 %v224
    %328 = vmatpush.msra.mxu0 %v222
    %329 = vmatpush.msra.mxu0 %v220
    %330 = vmatpush.msra.mxu0 %v218
    %331 = vmatpush.msra.mxu0 %v216
    %332 = vmatpush.msra.mxu0 %v214
    %333 = vmatpush.msra.mxu0 %v212
    %334 = vmatpush.msra.mxu0 %v210
    %335 = vmatpush.msra.mxu0 %v208
    %336 = vmatpush.msra.mxu0 %v206
    %337 = vmatpush.msra.mxu0 %v204
    %338 = vmatpush.msra.mxu0 %v202
    %339 = vmatpush.msra.mxu0 %v200
    %340 = vmatmul.f32.gmra.mxu0 %v160
    %v341 = vpop.f32.mrf.mxu0
    %v342 = vadd.f32 %v313, %v341
    %343 = vmatmul.f32.gmra.mxu0 %v162
    %v344 = vpop.f32.mrf.mxu0
    %v345 = vadd.f32 %v316, %v344
    %346 = vmatmul.f32.gmra.mxu0 %v164
    %v347 = vpop.f32.mrf.mxu0
    %v348 = vadd.f32 %v319, %v347
    %349 = vmatmul.f32.gmra.mxu0 %v166
    %v350 = vpop.f32.mrf.mxu0
    %v351 = vadd.f32 %v322, %v350
    %352 = vdwg.mxu0
    %v353 = vmax.f32 %v284, 0.0
    %v354 = vmax.f32 %v342, 0.0
    %v355 = vmax.f32 %v287, 0.0
    %v356 = vmax.f32 %v345, 0.0
    %v357 = vmax.f32 %v290, 0.0
    %v358 = vmax.f32 %v348, 0.0
    %v359 = vmax.f32 %v293, 0.0
    %v360 = vmax.f32 %v351, 0.0
    %361 = vst [vmem:[#allocation6] sm:$0xff] %v353
    %362 = vst [vmem:[#allocation6 + $0x8] sm:$0xff] %v354
    %363 = vst [vmem:[#allocation6 + $0x10] sm:$0xff] %v355
    %364 = vst [vmem:[#allocation6 + $0x18] sm:$0xff] %v356
    %365 = vst [vmem:[#allocation6 + $0x20] sm:$0xff] %v357
    %366 = vst [vmem:[#allocation6 + $0x28] sm:$0xff] %v358
    %367 = vst [vmem:[#allocation6 + $0x30] sm:$0xff] %v359
    %368 = vst [vmem:[#allocation6 + $0x38] sm:$0xff] %v360
    // Predicated region
    $region30: #{tpu_custom_call.1} parent=1 // pred_check
      _
    $region31: #{tpu_custom_call.1} parent=1 // pred_check_branch
      %370 = sbr.rel (0) target = $region33
    $region32: #{tpu_custom_call.1} parent=1 // pred_region
      %372 = vsyncadd [#allocation5], 0
      %s373 = sshll.u32 [#allocation6], 4
      %s374 = int_to_ptr.vmem [resolvable:$true] %s373
      %s375 = sshll.u32 %s6, 4
      %s376 = int_to_ptr.hbm [resolvable:$true] %s375
      %381 = dma.vmem_to_hbm [thread:$0]  %s374, 1024, %s376, [#allocation5], 256, 256, 16
    $region33: #{tpu_custom_call.1} parent=1 // pred_fallthru
      _
    // Predicated region
    $region34: #{tpu_custom_call.1} parent=1 // pred_check
      _
    $region35: #{tpu_custom_call.1} parent=1 // pred_check_branch
      %383 = sbr.rel (0) target = $region37
    $region36: #{tpu_custom_call.1} parent=1 // pred_region
      %385 = dma.done [#allocation5], 1024
    $region37: #{tpu_custom_call.1} parent=1 // pred_fallthru
      _
    %386 = vsyncpa [#allocation4], 1
    %387 = vsyncpa [#allocation5], 1

</llo_original>
